<compile_context>
chip_gen: v6e
topology: v6e:2x2x1
jax: 0.10.0
libtpu: 0.0.40
codegen_flags: <defaults>
</compile_context>

<pallas_src>
import functools

import jax
import jax.numpy as jnp
from jax.experimental import pallas as pl
from jax.experimental.pallas import tpu as pltpu


def _round_up(x, m):
    return (x + m - 1) // m * m


def _cdiv(a, b):
    return -(-a // b)


def _temporal_block_kernel(xc_ref, w1d_ref, b1d_ref, w2_ref, b2_ref,
                           out_ref, h1buf_ref, *,
                           tbl, lp, k, dilation, pad, pad_rows, cp, tb):
    """One grid step: `tb` sequences x `lp` timesteps, channels padded to `cp`.

    xc_ref   : (tbl, k*Cin)        im2col of the causally padded input (tbl = tb*lp)
    w1d_ref  : (k*Cin, 2*cp)       [ conv1 weights | embedded 1x1-downsample weights ]
    b1d_ref  : (1, 2*cp)           [ conv1 bias    | downsample bias ]
    w2_ref   : (k*cp, cp)          conv2 weights, one (cp, cp) block per tap
    b2_ref   : (1, cp)
    out_ref  : (tbl, cp)           final block output (f32)
    h1buf_ref: (pad_rows+tbl, cp)  scratch: causal zero pad + relu1 output
    """
    # ---- fused conv1 + 1x1 downsample: a single MXU matmul ------------------
    y1 = jnp.dot(xc_ref[...], w1d_ref[...], preferred_element_type=jnp.float32)
    y1 = y1 + b1d_ref[...]
    h1 = jnp.maximum(y1[:, :cp], 0.0)          # relu1 (dropout1 = identity, eval)
    res = y1[:, cp:]                           # downsample(x) + bias (residual)

    # ---- stage relu1 output behind a causal zero pad -------------------------
    # only the pad rows are zeroed (sublane/packing aligned); the data rows are
    # fully overwritten right below.
    if pad_rows > 0:
        h1buf_ref[0:pad_rows, :] = jnp.zeros((pad_rows, cp), h1buf_ref.dtype)
    h1buf_ref[pad_rows:pad_rows + tbl, :] = h1.astype(h1buf_ref.dtype)

    # ---- conv2: K dilated causal taps, each a lane-dense (tbl,cp)@(cp,cp) dot
    if tb > 1 and k > 1:
        # timestep within each sequence: used to mask tap reads that would
        # otherwise cross a sequence boundary inside the folded tb*lp block.
        t_in_seq = jax.lax.broadcasted_iota(jnp.int32, (tbl, 1), 0) % lp
    acc2 = jnp.zeros((tbl, cp), jnp.float32)
    for j in range(k):                          # k is small & static -> unrolled
        shift = pad - j * dilation              # = (k-1-j)*dilation
        tap = h1buf_ref[pad_rows - shift:pad_rows - shift + tbl, :]
        if tb > 1 and shift > 0:
            tap = jnp.where(t_in_seq >= shift, tap, jnp.zeros((), tap.dtype))
        acc2 += jnp.dot(tap, w2_ref[j * cp:(j + 1) * cp, :],
                        preferred_element_type=jnp.float32)
    h2 = jnp.maximum(acc2 + b2_ref[...], 0.0)   # relu2 (dropout2 = identity, eval)

    # ---- residual add + final relu -------------------------------------------
    out_ref[...] = jnp.maximum(h2 + res, 0.0).astype(out_ref.dtype)


@functools.partial(jax.jit,
                   static_argnames=("kernel_size", "dilation", "compute_dtype"))
def temporal_block(x, w1_oik, b1, w2_oik, b2, wd_oik, bd, *,
                   kernel_size, dilation, compute_dtype=jnp.bfloat16):
    """_TemporalBlock.forward (eval mode).

    x       : (B, Cin, L)     PyTorch NCL layout
    w1_oik  : (Cout, Cin, K)  effective (weight-normalized) conv1 weight
    w2_oik  : (Cout, Cout, K) effective (weight-normalized) conv2 weight
    wd_oik  : (Cout, Cin, 1)  1x1 downsample weight, or None (identity residual)
    returns : (B, Cout, L)
    """
    B, Cin, L = x.shape
    K = kernel_size
    d = dilation
    Cout = w1_oik.shape[0]
    P = (K - 1) * d                              # causal pad (== chomp size)

    f32 = jnp.float32
    LANE = 128
    itemsz = jnp.dtype(compute_dtype).itemsize
    sub = (8 * 4) // itemsz                      # sublane packing: 8 f32 / 16 bf16

    Cp = _round_up(Cout, LANE)                   # lane-dense channel dim
    Lp = _round_up(L, sub)                       # sublane-aligned time dim
    pad_rows = _round_up(P, sub) if P > 0 else 0

    # Fold `tb` sequences into the matmul M dimension, but keep >= 2 grid steps
    # when possible so both of v7x's TensorCores get work.
    tb = max(1, min(B, 256 // Lp))
    if B >= 2 and _cdiv(B, tb) < 2:
        tb = _cdiv(B, 2)
    Bp = _cdiv(B, tb) * tb
    TBL = tb * Lp
    num_steps = Bp // tb

    # --- weights: conv1 + downsample fused into one (K*Cin, 2*Cp) matrix -----
    w1_kio = jnp.transpose(w1_oik, (2, 1, 0)).astype(f32)           # (K, Cin, Cout)
    w1_col = jnp.pad(w1_kio, ((0, 0), (0, 0), (0, Cp - Cout))).reshape(K * Cin, Cp)
    if wd_oik is None:
        wd = jnp.eye(Cin, Cout, dtype=f32)       # identity residual (Cin == Cout)
        bd_vec = jnp.zeros((Cout,), f32)
    else:
        wd = jnp.transpose(wd_oik[:, :, 0], (1, 0)).astype(f32)     # (Cin, Cout)
        bd_vec = bd.astype(f32)
    # the 1x1 conv sees x[t], i.e. the last tap of the im2col slab
    wd_col = jnp.zeros((K * Cin, Cp), f32).at[(K - 1) * Cin:, :Cout].set(wd)
    w1d = jnp.concatenate([w1_col, wd_col], axis=1).astype(compute_dtype)
    b1d = jnp.concatenate([jnp.pad(b1.astype(f32), (0, Cp - Cout)),
                           jnp.pad(bd_vec, (0, Cp - Cout))]).reshape(1, 2 * Cp)

    w2_kio = jnp.transpose(w2_oik, (2, 1, 0)).astype(f32)           # (K, Cout, Cout)
    w2_col = jnp.pad(w2_kio, ((0, 0), (0, Cp - Cout), (0, Cp - Cout)))
    w2_col = w2_col.reshape(K * Cp, Cp).astype(compute_dtype)
    b2p = jnp.pad(b2.astype(f32), (0, Cp - Cout)).reshape(1, Cp)

    # --- im2col of the causally padded input (fused into few HBM passes by jit)
    x_nlc = jnp.transpose(x, (0, 2, 1)).astype(compute_dtype)       # (B, L, Cin)
    x_nlc = jnp.pad(x_nlc, ((0, Bp - B), (0, Lp - L), (0, 0)))      # (Bp, Lp, Cin)
    xpad = jnp.pad(x_nlc, ((0, 0), (P, 0), (0, 0)))                 # causal left pad
    xcol = jnp.concatenate([xpad[:, j * d:j * d + Lp, :] for j in range(K)],
                           axis=-1)                                 # (Bp, Lp, K*Cin)
    xcol = xcol.reshape(Bp * Lp, K * Cin)

    kern = functools.partial(_temporal_block_kernel, tbl=TBL, lp=Lp, k=K,
                             dilation=d, pad=P, pad_rows=pad_rows, cp=Cp, tb=tb)

    # VMEM budget: double-buffered in/out blocks + weights + scratch, with slack.
    est_bytes = (2 * TBL * K * Cin * itemsz
                 + 2 * TBL * Cp * 4
                 + 2 * (w1d.size + w2_col.size) * itemsz
                 + 2 * (b1d.size + b2p.size) * 4
                 + (pad_rows + TBL) * Cp * itemsz)
    vmem_limit = int(min(64 * 2 ** 20, max(16 * 2 ** 20, 4 * est_bytes)))

    # TODO(synk): very long sequences would additionally need a time-tiled grid
    # with a (K-1)*dilation halo to stay inside v7x's 64 MiB VMEM.
    out2d = pl.pallas_call(
        kern,
        out_shape=jax.ShapeDtypeStruct((Bp * Lp, Cp), jnp.float32),
        grid_spec=pltpu.PrefetchScalarGridSpec(
            num_scalar_prefetch=0,
            grid=(num_steps,),
            in_specs=[
                pl.BlockSpec((TBL, K * Cin), lambda i: (i, 0)),     # x im2col
                pl.BlockSpec((K * Cin, 2 * Cp), lambda i: (0, 0)),  # [W1 | Wd]
                pl.BlockSpec((1, 2 * Cp), lambda i: (0, 0)),        # [b1 | bd]
                pl.BlockSpec((K * Cp, Cp), lambda i: (0, 0)),       # W2
                pl.BlockSpec((1, Cp), lambda i: (0, 0)),            # b2
            ],
            out_specs=pl.BlockSpec((TBL, Cp), lambda i: (i, 0)),
            scratch_shapes=[pltpu.VMEM((pad_rows + TBL, Cp), compute_dtype)],
        ),
        compiler_params=pltpu.CompilerParams(
            dimension_semantics=("parallel",),
            vmem_limit_bytes=vmem_limit),
    )(xcol, w1d, b1d, w2_col, b2p)

    out = out2d.reshape(Bp, Lp, Cp)[:B, :L, :Cout]
    return jnp.transpose(out, (0, 2, 1))         # back to (B, Cout, L)


def _weight_norm(v, g):
    """PyTorch weight_norm (dim=0): w[o] = g[o] * v[o] / ||v[o]||.  v: (O, I, K)."""
    norm = jnp.sqrt(jnp.sum(v * v, axis=(1, 2), keepdims=True))
    return g.reshape(-1, 1, 1) * v / norm


def _reference(x, w1_oik, b1, w2_oik, b2, wd_oik, bd, *, dilation, padding):
    """Pure-JAX reference mirroring the PyTorch forward (eval mode)."""
    dn = ("NCH", "OIH", "NCH")

    def conv(inp, w, b):
        y = jax.lax.conv_general_dilated(
            inp, w, window_strides=(1,), padding=[(padding, padding)],
            rhs_dilation=(dilation,), dimension_numbers=dn)
        return y + b.reshape(1, -1, 1)

    h = conv(x, w1_oik, b1)[:, :, :-padding]                        # chomp1
    h = jnp.maximum(h, 0.0)                                         # relu1 (+dropout id)
    h = conv(h, w2_oik, b2)[:, :, :-padding]                        # chomp2
    h = jnp.maximum(h, 0.0)                                         # relu2 (+dropout id)
    res = jax.lax.conv_general_dilated(
        x, wd_oik, window_strides=(1,), padding=[(0, 0)],
        dimension_numbers=dn) + bd.reshape(1, -1, 1)
    return jnp.maximum(h + res, 0.0)


if __name__ == "__main__":
    # Small shapes consistent with the module: n_inputs=4, n_outputs=8,
    # kernel_size=3, stride=1, dilation=2, padding=(k-1)*dilation=4, L=16.
    # B=4 so both the batch-folding (tb=2) and the >=2-grid-step paths run.
    B, Cin, Cout, K, dil, L = 4, 4, 8, 3, 2, 16
    P = (K - 1) * dil

    key = jax.random.PRNGKey(0)
    ks = jax.random.split(key, 8)

    x = jax.random.normal(ks[0], (B, Cin, L), jnp.float32)

    # Deterministic parameter init (weight_norm: v ~ N(0, 0.01), g > 0).
    v1 = 0.01 * jax.random.normal(ks[1], (Cout, Cin, K), jnp.float32)
    g1 = 0.5 + jax.random.uniform(ks[2], (Cout,), jnp.float32)
    b1 = 0.01 * jax.random.normal(ks[3], (Cout,), jnp.float32)
    v2 = 0.01 * jax.random.normal(ks[4], (Cout, Cout, K), jnp.float32)
    g2 = 0.5 + jax.random.uniform(ks[5], (Cout,), jnp.float32)
    b2 = 0.01 * jax.random.normal(ks[6], (Cout,), jnp.float32)
    wd_oik = 0.01 * jax.random.normal(ks[7], (Cout, Cin, 1), jnp.float32)
    bd = jnp.zeros((Cout,), jnp.float32)

    w1_oik = _weight_norm(v1, g1)                                   # (Cout, Cin, K)
    w2_oik = _weight_norm(v2, g2)                                   # (Cout, Cout, K)

    ref = _reference(x, w1_oik, b1, w2_oik, b2, wd_oik, bd,
                     dilation=dil, padding=P)

    # f32 MXU-input path: tight check against the pure-JAX reference.
    out_f32 = jax.block_until_ready(
        temporal_block(x, w1_oik, b1, w2_oik, b2, wd_oik, bd,
                       kernel_size=K, dilation=dil, compute_dtype=jnp.float32))
    assert out_f32.shape == (B, Cout, L)
    assert jnp.allclose(out_f32, ref, atol=1e-4, rtol=1e-4), "f32 mismatch vs reference"

    # Production path: bf16 MXU inputs, f32 accumulation (v6e/v7x MXU peak).
    out_bf16 = jax.block_until_ready(
        temporal_block(x, w1_oik, b1, w2_oik, b2, wd_oik, bd,
                       kernel_size=K, dilation=dil, compute_dtype=jnp.bfloat16))
    assert out_bf16.shape == (B, Cout, L)
    assert jnp.allclose(out_bf16, ref, atol=5e-2, rtol=5e-2), "bf16 mismatch vs reference"

    print("KERNEL_OK")
</pallas_src>

<mosaic_0001>
module attributes {stable_mosaic.version = 11 : i64} {
  func.func @_temporal_block_kernel(%arg0: i32, %arg1: memref<32x12xf32, #tpu.memory_space<vmem>>, %arg2: memref<12x256xf32, #tpu.memory_space<vmem>>, %arg3: memref<1x256xf32, #tpu.memory_space<vmem>>, %arg4: memref<384x128xf32, #tpu.memory_space<vmem>>, %arg5: memref<1x128xf32, #tpu.memory_space<vmem>>, %arg6: memref<32x128xf32, #tpu.memory_space<vmem>>, %arg7: memref<40x128xf32, #tpu.memory_space<vmem>>) attributes {dimension_semantics = [#tpu.dimension_semantics<parallel>], iteration_bounds = array<i64: 2>, scalar_prefetch = 0 : i64, scratch_operands = 1 : i64, tpu.core_type = #tpu.core_type<tc>, window_params = [{transform_indices = @transform_0, window_bounds = array<i64: 32, 12>}, {pipeline_mode = #tpu.pipeline_mode<synchronous>, transform_indices = @transform_1, window_bounds = array<i64: 12, 256>}, {pipeline_mode = #tpu.pipeline_mode<synchronous>, transform_indices = @transform_2, window_bounds = array<i64: 1, 256>}, {pipeline_mode = #tpu.pipeline_mode<synchronous>, transform_indices = @transform_3, window_bounds = array<i64: 384, 128>}, {pipeline_mode = #tpu.pipeline_mode<synchronous>, transform_indices = @transform_4, window_bounds = array<i64: 1, 128>}, {transform_indices = @transform_5, window_bounds = array<i64: 32, 128>}]} {
    %c0 = arith.constant 0 : index
    %c0_0 = arith.constant 0 : index
    %0 = vector.load %arg1[%c0, %c0_0] : memref<32x12xf32, #tpu.memory_space<vmem>>, vector<32x12xf32>
    %c0_1 = arith.constant 0 : index
    %c0_2 = arith.constant 0 : index
    %1 = vector.load %arg2[%c0_1, %c0_2] : memref<12x256xf32, #tpu.memory_space<vmem>>, vector<12x256xf32>
    %cst = arith.constant dense<0.000000e+00> : vector<32x256xf32>
    %2 = tpu.matmul %0, %1, %cst {dimension_numbers = #tpu.dot_dimension_numbers<[1], [0], [0], [1], [0, 0, 1, 1], [], []>} : vector<32x12xf32>, vector<12x256xf32>, vector<32x256xf32> -> vector<32x256xf32>
    %c0_3 = arith.constant 0 : index
    %c0_4 = arith.constant 0 : index
    %3 = vector.load %arg3[%c0_3, %c0_4] : memref<1x256xf32, #tpu.memory_space<vmem>>, vector<1x256xf32>
    %4 = vector.broadcast %3 : vector<1x256xf32> to vector<32x256xf32>
    %5 = arith.addf %2, %4 : vector<32x256xf32>
    %6 = vector.extract_strided_slice %5 {offsets = [0, 0], sizes = [32, 128], strides = [1, 1]} : vector<32x256xf32> to vector<32x128xf32>
    %cst_5 = arith.constant 0.000000e+00 : f32
    %7 = vector.broadcast %cst_5 : f32 to vector<32x128xf32>
    %8 = arith.maximumf %6, %7 : vector<32x128xf32>
    %9 = vector.extract_strided_slice %5 {offsets = [0, 128], sizes = [32, 128], strides = [1, 1]} : vector<32x256xf32> to vector<32x128xf32>
    %cst_6 = arith.constant 0.000000e+00 : f32
    %10 = vector.broadcast %cst_6 : f32 to vector<8x128xf32>
    %c0_7 = arith.constant 0 : index
    %c0_8 = arith.constant 0 : index
    %11 = vector.load %arg7[%c0_7, %c0_8] : memref<40x128xf32, #tpu.memory_space<vmem>>, vector<8x128xf32>
    tpu.vector_store %arg7[%c0_7, %c0_8], %10 {strides = array<i32>} : memref<40x128xf32, #tpu.memory_space<vmem>>, vector<8x128xf32>,
    %c8 = arith.constant 8 : index
    %c0_9 = arith.constant 0 : index
    %12 = vector.load %arg7[%c8, %c0_9] : memref<40x128xf32, #tpu.memory_space<vmem>>, vector<32x128xf32>
    tpu.vector_store %arg7[%c8, %c0_9], %8 {strides = array<i32>} : memref<40x128xf32, #tpu.memory_space<vmem>>, vector<32x128xf32>,
    %13 = tpu.iota {dimensions = array<i32: 0>} : vector<32x1xi32>
    %c16_i32 = arith.constant 16 : i32
    %c0_i32 = arith.constant 0 : i32
    %14 = arith.cmpi eq, %c16_i32, %c0_i32 : i32
    %c1_i32 = arith.constant 1 : i32
    %15 = arith.select %14, %c1_i32, %c16_i32 : i32
    %16 = vector.broadcast %15 : i32 to vector<32x1xi32>
    %17 = arith.remsi %13, %16 : vector<32x1xi32>
    %c0_i32_10 = arith.constant 0 : i32
    %18 = vector.broadcast %c0_i32_10 : i32 to vector<32x1xi32>
    %19 = arith.cmpi ne, %17, %18 : vector<32x1xi32>
    %c0_i32_11 = arith.constant 0 : i32
    %20 = vector.broadcast %c0_i32_11 : i32 to vector<32x1xi32>
    %21 = arith.cmpi slt, %17, %20 : vector<32x1xi32>
    %c0_i32_12 = arith.constant 0 : i32
    %22 = arith.cmpi slt, %15, %c0_i32_12 : i32
    %23 = vector.broadcast %22 : i1 to vector<32x1xi1>
    %24 = vector.broadcast %23 : vector<32x1xi1> to vector<32x1xi1>
    %25 = arith.xori %21, %24 : vector<32x1xi1>
    %26 = arith.andi %25, %19 : vector<32x1xi1>
    %27 = vector.broadcast %15 : i32 to vector<32x1xi32>
    %28 = arith.addi %17, %27 : vector<32x1xi32>
    %29 = arith.select %26, %28, %17 : vector<32x1xi1>, vector<32x1xi32>
    %cst_13 = arith.constant 0.000000e+00 : f32
    %30 = vector.broadcast %cst_13 : f32 to vector<32x128xf32>
    %c4 = arith.constant 4 : index
    %c0_14 = arith.constant 0 : index
    %31 = vector.load %arg7[%c4, %c0_14] : memref<40x128xf32, #tpu.memory_space<vmem>>, vector<32x128xf32>
    %c4_i32 = arith.constant 4 : i32
    %32 = vector.broadcast %c4_i32 : i32 to vector<32x1xi32>
    %33 = arith.cmpi sge, %29, %32 : vector<32x1xi32>
    %cst_15 = arith.constant 0.000000e+00 : f32
    %34 = vector.shape_cast %33 : vector<32x1xi1> to vector<32x1xi1>
    %35 = vector.broadcast %34 : vector<32x1xi1> to vector<32x128xi1>
    %36 = vector.broadcast %cst_15 : f32 to vector<32x128xf32>
    %37 = arith.select %35, %31, %36 : vector<32x128xi1>, vector<32x128xf32>
    %c0_16 = arith.constant 0 : index
    %c0_17 = arith.constant 0 : index
    %38 = vector.load %arg4[%c0_16, %c0_17] : memref<384x128xf32, #tpu.memory_space<vmem>>, vector<128x128xf32>
    %cst_18 = arith.constant dense<0.000000e+00> : vector<32x128xf32>
    %39 = tpu.matmul %37, %38, %cst_18 {dimension_numbers = #tpu.dot_dimension_numbers<[1], [0], [0], [1], [0, 0, 1, 1], [], []>} : vector<32x128xf32>, vector<128x128xf32>, vector<32x128xf32> -> vector<32x128xf32>
    %40 = arith.addf %30, %39 : vector<32x128xf32>
    %c6 = arith.constant 6 : index
    %c0_19 = arith.constant 0 : index
    %41 = vector.load %arg7[%c6, %c0_19] : memref<40x128xf32, #tpu.memory_space<vmem>>, vector<32x128xf32>
    %c2_i32 = arith.constant 2 : i32
    %42 = vector.broadcast %c2_i32 : i32 to vector<32x1xi32>
    %43 = arith.cmpi sge, %29, %42 : vector<32x1xi32>
    %cst_20 = arith.constant 0.000000e+00 : f32
    %44 = vector.shape_cast %43 : vector<32x1xi1> to vector<32x1xi1>
    %45 = vector.broadcast %44 : vector<32x1xi1> to vector<32x128xi1>
    %46 = vector.broadcast %cst_20 : f32 to vector<32x128xf32>
    %47 = arith.select %45, %41, %46 : vector<32x128xi1>, vector<32x128xf32>
    %c128 = arith.constant 128 : index
    %c0_21 = arith.constant 0 : index
    %48 = vector.load %arg4[%c128, %c0_21] : memref<384x128xf32, #tpu.memory_space<vmem>>, vector<128x128xf32>
    %cst_22 = arith.constant dense<0.000000e+00> : vector<32x128xf32>
    %49 = tpu.matmul %47, %48, %cst_22 {dimension_numbers = #tpu.dot_dimension_numbers<[1], [0], [0], [1], [0, 0, 1, 1], [], []>} : vector<32x128xf32>, vector<128x128xf32>, vector<32x128xf32> -> vector<32x128xf32>
    %50 = arith.addf %40, %49 : vector<32x128xf32>
    %c8_23 = arith.constant 8 : index
    %c0_24 = arith.constant 0 : index
    %51 = vector.load %arg7[%c8_23, %c0_24] : memref<40x128xf32, #tpu.memory_space<vmem>>, vector<32x128xf32>
    %c256 = arith.constant 256 : index
    %c0_25 = arith.constant 0 : index
    %52 = vector.load %arg4[%c256, %c0_25] : memref<384x128xf32, #tpu.memory_space<vmem>>, vector<128x128xf32>
    %cst_26 = arith.constant dense<0.000000e+00> : vector<32x128xf32>
    %53 = tpu.matmul %51, %52, %cst_26 {dimension_numbers = #tpu.dot_dimension_numbers<[1], [0], [0], [1], [0, 0, 1, 1], [], []>} : vector<32x128xf32>, vector<128x128xf32>, vector<32x128xf32> -> vector<32x128xf32>
    %54 = arith.addf %50, %53 : vector<32x128xf32>
    %c0_27 = arith.constant 0 : index
    %c0_28 = arith.constant 0 : index
    %55 = vector.load %arg5[%c0_27, %c0_28] : memref<1x128xf32, #tpu.memory_space<vmem>>, vector<1x128xf32>
    %56 = vector.broadcast %55 : vector<1x128xf32> to vector<32x128xf32>
    %57 = arith.addf %54, %56 : vector<32x128xf32>
    %cst_29 = arith.constant 0.000000e+00 : f32
    %58 = vector.broadcast %cst_29 : f32 to vector<32x128xf32>
    %59 = arith.maximumf %57, %58 : vector<32x128xf32>
    %60 = arith.addf %59, %9 : vector<32x128xf32>
    %cst_30 = arith.constant 0.000000e+00 : f32
    %61 = vector.broadcast %cst_30 : f32 to vector<32x128xf32>
    %62 = arith.maximumf %60, %61 : vector<32x128xf32>
    %c0_31 = arith.constant 0 : index
    %c0_32 = arith.constant 0 : index
    %63 = vector.load %arg6[%c0_31, %c0_32] : memref<32x128xf32, #tpu.memory_space<vmem>>, vector<32x128xf32>
    tpu.vector_store %arg6[%c0_31, %c0_32], %62 {strides = array<i32>} : memref<32x128xf32, #tpu.memory_space<vmem>>, vector<32x128xf32>,
    return
  }
  func.func @transform_0(%arg0: i32) -> (i32, i32) {
    %c0_i32 = arith.constant 0 : i32
    %c0_i32_0 = arith.constant 0 : i32
    return %arg0, %c0_i32 : i32, i32
  }
  func.func @transform_1(%arg0: i32) -> (i32, i32) {
    %c0_i32 = arith.constant 0 : i32
    %c0_i32_0 = arith.constant 0 : i32
    %c0_i32_1 = arith.constant 0 : i32
    return %c0_i32, %c0_i32_0 : i32, i32
  }
  func.func @transform_2(%arg0: i32) -> (i32, i32) {
    %c0_i32 = arith.constant 0 : i32
    %c0_i32_0 = arith.constant 0 : i32
    %c0_i32_1 = arith.constant 0 : i32
    return %c0_i32, %c0_i32_0 : i32, i32
  }
  func.func @transform_3(%arg0: i32) -> (i32, i32) {
    %c0_i32 = arith.constant 0 : i32
    %c0_i32_0 = arith.constant 0 : i32
    %c0_i32_1 = arith.constant 0 : i32
    return %c0_i32, %c0_i32_0 : i32, i32
  }
  func.func @transform_4(%arg0: i32) -> (i32, i32) {
    %c0_i32 = arith.constant 0 : i32
    %c0_i32_0 = arith.constant 0 : i32
    %c0_i32_1 = arith.constant 0 : i32
    return %c0_i32, %c0_i32_0 : i32, i32
  }
  func.func @transform_5(%arg0: i32) -> (i32, i32) {
    %c0_i32 = arith.constant 0 : i32
    %c0_i32_0 = arith.constant 0 : i32
    return %arg0, %c0_i32 : i32, i32
  }
}

</mosaic_0001>

<llo_original>
// kernel: temporal_block.1
$region0: #{temporal_block.1}
  #allocation0 [shape = 'u32[]', space=smem, size = 0x4, offset = 0x4, fixed_abs, tag = 'smem constant byte address 0x4 - core index']
  #allocation1 [shape = 'u32[144,128]{1,0:T(1,128)}', space=vmem, size = 0x12000, scoped, tag = 'internal scratch']
  #allocation2 [shape = 'f32[40,128]{1,0:T(8,128)}', space=vmem, size = 0x5000, scoped, tag = 'scratch operand']
  %s0 = inlined_call_operand.vmem [shape: f32[64,12], index: 0, kind: input, shape index: {}]
  %s1 = inlined_call_operand.vmem [shape: f32[12,256], index: 1, kind: input, shape index: {}]
  %s2 = inlined_call_operand.vmem [shape: f32[1,256], index: 2, kind: input, shape index: {}]
  %s3 = inlined_call_operand.vmem [shape: f32[384,128], index: 3, kind: input, shape index: {}]
  %s4 = inlined_call_operand.vmem [shape: f32[1,128], index: 4, kind: input, shape index: {}]
  %s5 = inlined_call_operand.vmem [shape: f32[64,128], index: 5, kind: output, shape index: {}]
  %s6 = sld [smem:[#allocation0]]
  $region53: #{temporal_block.1} parent=0
    _
  %s8 = ssub.s32 1, %s6
  %s9 = scalar_select 0, %s8, %s6
  loop: start=0, step=1, limit=4
  $region2: #{temporal_block.1} parent=0 // loop_pre_header
    _
  $region3: #{temporal_block.1} parent=0 // loop_header
    %s11 = sphi 0, %s15
    %p12 = scmp.ge.s32.totalorder %s11, 4
    %s21 = sphi 0, %s23
    %s24 = sphi 0, %s21
    %s25 = sphi 0, %s24
    %s41 = sphi 0, %s25
    %s45 = sphi 0, %s45
    %s47 = sphi 0, %s45
    %s48 = sphi 0, %s47
    %s62 = sphi 0, %s48
    %s66 = sphi 0, %s66
    %s68 = sphi 0, %s66
    %s69 = sphi 0, %s68
    %s83 = sphi 0, %s69
    %s87 = sphi 0, %s87
    %s89 = sphi 0, %s87
    %s90 = sphi 0, %s89
    %s104 = sphi 0, %s90
    %s108 = sphi 0, %s108
    %s110 = sphi 0, %s108
    %s111 = sphi 0, %s110
    %s125 = sphi 0, %s111
    %s131 = sphi 0, %s133
    %s134 = sphi 0, %s131
    %s135 = sphi 0, %s134
    %s151 = sphi 0, %s135
  $region4: #{temporal_block.1} parent=0 // loop_header_branch
    %14 = sbr.rel (%p12) target = $region8
  $region5: #{temporal_block.1} parent=0 // loop_body
    %s16 = ssub.s32 %s11, 1
    %s17 = ssub.s32 %s11, 2
    %s18 = sadd.s32 %s11, 1
    %s19 = ssub.s32 %s11, %s18
    %p20 = scmp.eq.s32.totalorder %s19, 0
    %s22 = sadd.s32 %s21, 1
    %s23 = scalar_select %p20, %s21, %s22
    %p26 = pneg %p20
    %p27 = scmp.eq.s32.totalorder %s11, 1
    %p28 = por %p26, %p27
    %p29 = scmp.ne.s32.totalorder %s21, %s24
    %p30 = scmp.eq.s32.totalorder %s11, 0
    %p31 = por %p29, %p30
    %p32 = scmp.ne.s32.totalorder %s21, %s24
    %p33 = scmp.eq.s32.totalorder %s16, 1
    %p34 = por %p32, %p33
    %p35 = scmp.ne.s32.totalorder %s24, %s25
    %p36 = scmp.eq.s32.totalorder %s16, 0
    %p37 = por %p35, %p36
    %p38 = scmp.ne.s32.totalorder %s24, %s25
    %p39 = scmp.eq.s32.totalorder %s17, 1
    %p40 = por %p38, %p39
    %p42 = scmp.ne.s32.totalorder %s25, %s41
    %p43 = scmp.eq.s32.totalorder %s17, 0
    %p44 = por %p42, %p43
    %s46 = sadd.s32 %s45, 1
    %p49 = scmp.eq.s32.totalorder %s11, 1
    %p50 = scmp.ne.s32.totalorder %s45, %s47
    %p51 = scmp.eq.s32.totalorder %s11, 0
    %p52 = por %p50, %p51
    %p53 = scmp.ne.s32.totalorder %s45, %s47
    %p54 = scmp.eq.s32.totalorder %s16, 1
    %p55 = por %p53, %p54
    %p56 = scmp.ne.s32.totalorder %s47, %s48
    %p57 = scmp.eq.s32.totalorder %s16, 0
    %p58 = por %p56, %p57
    %p59 = scmp.ne.s32.totalorder %s47, %s48
    %p60 = scmp.eq.s32.totalorder %s17, 1
    %p61 = por %p59, %p60
    %p63 = scmp.ne.s32.totalorder %s48, %s62
    %p64 = scmp.eq.s32.totalorder %s17, 0
    %p65 = por %p63, %p64
    %s67 = sadd.s32 %s66, 1
    %p70 = scmp.eq.s32.totalorder %s11, 1
    %p71 = scmp.ne.s32.totalorder %s66, %s68
    %p72 = scmp.eq.s32.totalorder %s11, 0
    %p73 = por %p71, %p72
    %p74 = scmp.ne.s32.totalorder %s66, %s68
    %p75 = scmp.eq.s32.totalorder %s16, 1
    %p76 = por %p74, %p75
    %p77 = scmp.ne.s32.totalorder %s68, %s69
    %p78 = scmp.eq.s32.totalorder %s16, 0
    %p79 = por %p77, %p78
    %p80 = scmp.ne.s32.totalorder %s68, %s69
    %p81 = scmp.eq.s32.totalorder %s17, 1
    %p82 = por %p80, %p81
    %p84 = scmp.ne.s32.totalorder %s69, %s83
    %p85 = scmp.eq.s32.totalorder %s17, 0
    %p86 = por %p84, %p85
    %s88 = sadd.s32 %s87, 1
    %p91 = scmp.eq.s32.totalorder %s11, 1
    %p92 = scmp.ne.s32.totalorder %s87, %s89
    %p93 = scmp.eq.s32.totalorder %s11, 0
    %p94 = por %p92, %p93
    %p95 = scmp.ne.s32.totalorder %s87, %s89
    %p96 = scmp.eq.s32.totalorder %s16, 1
    %p97 = por %p95, %p96
    %p98 = scmp.ne.s32.totalorder %s89, %s90
    %p99 = scmp.eq.s32.totalorder %s16, 0
    %p100 = por %p98, %p99
    %p101 = scmp.ne.s32.totalorder %s89, %s90
    %p102 = scmp.eq.s32.totalorder %s17, 1
    %p103 = por %p101, %p102
    %p105 = scmp.ne.s32.totalorder %s90, %s104
    %p106 = scmp.eq.s32.totalorder %s17, 0
    %p107 = por %p105, %p106
    %s109 = sadd.s32 %s108, 1
    %p112 = scmp.eq.s32.totalorder %s11, 1
    %p113 = scmp.ne.s32.totalorder %s108, %s110
    %p114 = scmp.eq.s32.totalorder %s11, 0
    %p115 = por %p113, %p114
    %p116 = scmp.ne.s32.totalorder %s108, %s110
    %p117 = scmp.eq.s32.totalorder %s16, 1
    %p118 = por %p116, %p117
    %p119 = scmp.ne.s32.totalorder %s110, %s111
    %p120 = scmp.eq.s32.totalorder %s16, 0
    %p121 = por %p119, %p120
    %p122 = scmp.ne.s32.totalorder %s110, %s111
    %p123 = scmp.eq.s32.totalorder %s17, 1
    %p124 = por %p122, %p123
    %p126 = scmp.ne.s32.totalorder %s111, %s125
    %p127 = scmp.eq.s32.totalorder %s17, 0
    %p128 = por %p126, %p127
    %s129 = ssub.s32 %s11, %s18
    %p130 = scmp.eq.s32.totalorder %s129, 0
    %s132 = sadd.s32 %s131, 1
    %s133 = scalar_select %p130, %s131, %s132
    %p136 = pneg %p130
    %p137 = scmp.eq.s32.totalorder %s11, 1
    %p138 = por %p136, %p137
    %p139 = scmp.ne.s32.totalorder %s131, %s134
    %p140 = scmp.eq.s32.totalorder %s11, 0
    %p141 = por %p139, %p140
    %p142 = scmp.ne.s32.totalorder %s131, %s134
    %p143 = scmp.eq.s32.totalorder %s16, 1
    %p144 = por %p142, %p143
    %p145 = scmp.ne.s32.totalorder %s134, %s135
    %p146 = scmp.eq.s32.totalorder %s16, 0
    %p147 = por %p145, %p146
    %p148 = scmp.ne.s32.totalorder %s134, %s135
    %p149 = scmp.eq.s32.totalorder %s17, 1
    %p150 = por %p148, %p149
    %p152 = scmp.ne.s32.totalorder %s135, %s151
    %p153 = scmp.eq.s32.totalorder %s17, 0
    %p154 = por %p152, %p153
    %p155 = scmp.le.s32.totalorder 1, %s11
    %p156 = scmp.lt.s32.totalorder %s11, 3
    %p157 = pnand %p155, %p156
    %p158 = pneg %p157
    // Predicated region
    $region9: #{temporal_block.1} parent=5 // pred_check
      _
    $region10: #{temporal_block.1} parent=5 // pred_check_branch
      %160 = sbr.rel (%p157) target = $region12
    $region11: #{temporal_block.1} parent=5 // pred_region
      %s161 = ssub.s32 %s11, 1
      // Predicated region
      $region13: #{temporal_block.1} parent=11 // pred_check
        %p162 = pneg %p58
      $region14: #{temporal_block.1} parent=11 // pred_check_branch
        %164 = sbr.rel (%p162) target = $region16
      $region15: #{temporal_block.1} parent=11 // pred_region
        _
      $region16: #{temporal_block.1} parent=11 // pred_fallthru
        _
      // Predicated region
      $region17: #{temporal_block.1} parent=11 // pred_check
        %p165 = pneg %p79
      $region18: #{temporal_block.1} parent=11 // pred_check_branch
        %167 = sbr.rel (%p165) target = $region20
      $region19: #{temporal_block.1} parent=11 // pred_region
        _
      $region20: #{temporal_block.1} parent=11 // pred_fallthru
        _
      // Predicated region
      $region21: #{temporal_block.1} parent=11 // pred_check
        %p168 = pneg %p100
      $region22: #{temporal_block.1} parent=11 // pred_check_branch
        %170 = sbr.rel (%p168) target = $region24
      $region23: #{temporal_block.1} parent=11 // pred_region
        _
      $region24: #{temporal_block.1} parent=11 // pred_fallthru
        _
      // Predicated region
      $region25: #{temporal_block.1} parent=11 // pred_check
        %p171 = pneg %p121
      $region26: #{temporal_block.1} parent=11 // pred_check_branch
        %173 = sbr.rel (%p171) target = $region28
      $region27: #{temporal_block.1} parent=11 // pred_region
        _
      $region28: #{temporal_block.1} parent=11 // pred_fallthru
        _
    $region12: #{temporal_block.1} parent=5 // pred_fallthru
      _
    %p174 = scmp.lt.s32.totalorder %s11, 2
    // Predicated region
    $region29: #{temporal_block.1} parent=5 // pred_check
      %p175 = pneg %p174
    $region30: #{temporal_block.1} parent=5 // pred_check_branch
      %177 = sbr.rel (%p175) target = $region32
    $region31: #{temporal_block.1} parent=5 // pred_region
      // Predicated region
      $region33: #{temporal_block.1} parent=31 // pred_check
        %p178 = pneg %p31
      $region34: #{temporal_block.1} parent=31 // pred_check_branch
        %180 = sbr.rel (%p178) target = $region36
      $region35: #{temporal_block.1} parent=31 // pred_region
        %s181 = smul.u32 4, %s11
        %p182 = scmp.lt.s32.totalorder %s181, 7
        %s183 = scalar_select %p182, %s181, 7
        %s184 = smul.addr %s183, 8
        %s185 = scalar_lea.vmem %s0, %s184
        %s186 = smul.u32 4, %s11
      $region36: #{temporal_block.1} parent=31 // pred_fallthru
        _
    $region32: #{temporal_block.1} parent=5 // pred_fallthru
      _
    %p187 = scmp.le.s32.totalorder 1, %s11
    %p188 = scmp.lt.s32.totalorder %s11, 3
    %p189 = pnand %p187, %p188
    %p190 = pneg %p189
    // Predicated region
    $region37: #{temporal_block.1} parent=5 // pred_check
      _
    $region38: #{temporal_block.1} parent=5 // pred_check_branch
      %192 = sbr.rel (%p189) target = $region40
    $region39: #{temporal_block.1} parent=5 // pred_region
      %s193 = ssub.s32 %s11, 1
      %s194 = smul.u32 4, %s16
      %p195 = scmp.lt.s32.totalorder %s194, 7
      %s196 = scalar_select %p195, %s194, 7
      %s197 = smul.addr %s196, 8
      %s198 = scalar_lea.vmem %s0, %s197
      %p199 = pneg %p37
      %p200 = pneg %p34
      %p201 = pneg %p58
      %p202 = pneg %p55
      %p203 = pneg %p79
      %p204 = pneg %p76
      %p205 = pneg %p100
      %p206 = pneg %p97
      %p207 = pneg %p121
      %p208 = pneg %p118
      %p209 = pneg %p147
      %p210 = pneg %p144
      %s211 = smul.u32 4, %s16
      %p212 = scmp.lt.s32.totalorder %s211, 7
      %s213 = scalar_select %p212, %s211, 7
      %s214 = smul.addr %s213, 8
      %s215 = scalar_lea.vmem %s5, %s214
      %s216 = smul.u32 4, %s16
      %p217 = scmp.lt.s32.totalorder %s216, 7
      %s218 = scalar_select %p217, %s216, 7
      %s219 = smul.addr %s218, 8
      %s220 = scalar_lea.vmem %s0, %s219
      %s221 = smul.u32 4, %s16
      %s222 = smul.u32 4, %s16
      %p223 = scmp.lt.s32.totalorder %s222, 7
      %s224 = scalar_select %p223, %s222, 7
      %s225 = smul.addr %s224, 8
      %s226 = scalar_lea.vmem %s5, %s225
      %s227 = smul.u32 4, %s16
      %v228 = vld [vmem:[%s220] sm:$0xff]
      %v229 = vld [vmem:[%s220 + $0x8] sm:$0xff]
      %v230 = vld [vmem:[%s220 + $0x10] sm:$0xff]
      %v231 = vld [vmem:[%s220 + $0x18] sm:$0xff]
      %v232 = vld [vmem:[%s1] sm:$0xff]
      %v233 = vld [vmem:[%s1 + $0x8] sm:$0xff]
      %v234 = vld [vmem:[%s1 + $0x10] sm:$0xf]
      %v235 = vld [vmem:[%s1 + $0x18] sm:$0xf]
      %v236 = vld [vmem:[%s2] sm:$0x3]
      %v238 = vlaneseq
      %v239 = vshrl.u32 %v238, 7
      %v240 = vsub.s32 0, %v239
      %v241 = vrot.slane %v236, %v240
      %v242 = vlaneseq
      %v243 = vshrl.u32 %v242, 7
      %v244 = vsub.s32 1, %v243
      %v245 = vrot.slane %v236, %v244
      %vm248 = vcmask 97280
      %v250 = vsel %vm248, %v228, 0
      %v253 = vsel %vm248, %v229, 0
      %v256 = vsel %vm248, %v230, 0
      %v259 = vsel %vm248, %v231, 0
      %vm261 = vcmask 1043456
      %v263 = vsel %vm261, %v234, 0
      %v266 = vsel %vm261, %v235, 0
      %268 = vmatprep.subr.mxu0 0.0
      %269 = vmatpush1.msra.mxu0 0.0
      %270 = vmatprep.subr.mxu0 0.0
      %271 = vmatpush1.msra.mxu0 0.0
      %272 = vmatprep.subr.mxu0 0.0
      %273 = vmatpush1.msra.mxu0 0.0
      %274 = vmatprep.subr.mxu0 0.0
      %275 = vmatpush1.msra.mxu0 0.0
      %276 = vmatprep.subr.mxu0 0.0
      %277 = vmatpush1.msra.mxu0 0.0
      %278 = vmatprep.subr.mxu0 0.0
      %279 = vmatpush1.msra.mxu0 0.0
      %280 = vmatprep.subr.mxu0 0.0
      %281 = vmatpush1.msra.mxu0 0.0
      %282 = vmatprep.subr.mxu0 0.0
      %283 = vmatpush1.msra.mxu0 0.0
      %284 = vmatprep.subr.mxu0 0.0
      %285 = vmatpush1.msra.mxu0 0.0
      %286 = vmatprep.subr.mxu0 0.0
      %287 = vmatpush1.msra.mxu0 0.0
      %288 = vmatprep.subr.mxu0 0.0
      %289 = vmatpush1.msra.mxu0 0.0
      %290 = vmatprep.subr.mxu0 0.0
      %291 = vmatpush1.msra.mxu0 0.0
      %292 = vmatprep.subr.mxu0 0.0
      %293 = vmatpush1.msra.mxu0 0.0
      %294 = vmatprep.subr.mxu0 0.0
      %295 = vmatpush1.msra.mxu0 0.0
      %296 = vmatprep.subr.mxu0 %v266
      %297 = vmatpush1.msra.mxu0 %v263
      %298 = vmatprep.subr.mxu0 %v233
      %299 = vmatpush1.msra.mxu0 %v232
      %300 = vmatprep.subr.mxu0 0.0
      %301 = vmatpush2.msra.mxu0 0.0
      %302 = vmatprep.subr.mxu0 0.0
      %303 = vmatpush2.msra.mxu0 0.0
      %304 = vmatprep.subr.mxu0 0.0
      %305 = vmatpush2.msra.mxu0 0.0
      %306 = vmatprep.subr.mxu0 0.0
      %307 = vmatpush2.msra.mxu0 0.0
      %308 = vmatprep.subr.mxu0 0.0
      %309 = vmatpush2.msra.mxu0 0.0
      %310 = vmatprep.subr.mxu0 0.0
      %311 = vmatpush2.msra.mxu0 0.0
      %312 = vmatprep.subr.mxu0 0.0
      %313 = vmatpush2.msra.mxu0 0.0
      %314 = vmatprep.subr.mxu0 0.0
      %315 = vmatpush2.msra.mxu0 0.0
      %316 = vmatprep.subr.mxu0 0.0
      %317 = vmatpush2.msra.mxu0 0.0
      %318 = vmatprep.subr.mxu0 0.0
      %319 = vmatpush2.msra.mxu0 0.0
      %320 = vmatprep.subr.mxu0 0.0
      %321 = vmatpush2.msra.mxu0 0.0
      %322 = vmatprep.subr.mxu0 0.0
      %323 = vmatpush2.msra.mxu0 0.0
      %324 = vmatprep.subr.mxu0 0.0
      %325 = vmatpush2.msra.mxu0 0.0
      %326 = vmatprep.subr.mxu0 0.0
      %327 = vmatpush2.msra.mxu0 0.0
      %328 = vmatprep.subr.mxu0 0.0
      %329 = vmatpush2.msra.mxu0 0.0
      %330 = vmatprep.subr.mxu0 0.0
      %331 = vmatpush2.msra.mxu0 0.0
      %332 = vmatprep.mubr.f32.mxu0 0.0
      %333 = vmatmul.mubr.f32.gmra.mxu0 %v250
      %v334 = vpop.f32.mrf.mxu0
      %v335 = vadd.f32 %v241, %v334
      %v336 = vpop.f32.mrf.mxu0
      %v337 = vadd.f32 %v245, %v336
      %338 = vmatprep.mubr.f32.mxu0 0.0
      %339 = vmatmul.mubr.f32.gmra.mxu0 %v253
      %v340 = vpop.f32.mrf.mxu0
      %v341 = vadd.f32 %v241, %v340
      %v342 = vpop.f32.mrf.mxu0
      %v343 = vadd.f32 %v245, %v342
      %344 = vmatprep.mubr.f32.mxu0 0.0
      %345 = vmatmul.mubr.f32.gmra.mxu0 %v256
      %v346 = vpop.f32.mrf.mxu0
      %v347 = vadd.f32 %v241, %v346
      %v348 = vpop.f32.mrf.mxu0
      %v349 = vadd.f32 %v245, %v348
      %350 = vmatprep.mubr.f32.mxu0 0.0
      %351 = vmatmul.mubr.f32.gmra.mxu0 %v259
      %v352 = vpop.f32.mrf.mxu0
      %v353 = vadd.f32 %v241, %v352
      %v354 = vpop.f32.mrf.mxu0
      %v355 = vadd.f32 %v245, %v354
      %356 = vdwg.mxu0
      %v357 = vmax.f32 %v335, 0.0
      %v358 = vmax.f32 %v341, 0.0
      %v359 = vmax.f32 %v347, 0.0
      %v360 = vmax.f32 %v353, 0.0
      %361 = vst [vmem:[#allocation2] sm:$0xff] 0.0
      %362 = vst [vmem:[#allocation2 + $0x8] sm:$0xff] %v357
      %363 = vst [vmem:[#allocation2 + $0x10] sm:$0xff] %v358
      %364 = vst [vmem:[#allocation2 + $0x18] sm:$0xff] %v359
      %365 = vst [vmem:[#allocation2 + $0x20] sm:$0xff] %v360
      %v366 = vlaneseq
      %v367 = vshrl.u32 %v366, 7
      %v368 = vadd.s32 %v367, 8
      %v369 = vadd.s32 %v367, 16
      %v370 = vadd.s32 %v367, 24
      %vm371 = vcmp.lt.s32.totalorder %v367, 0
      %v372 = vsub.s32 0, %v367
      %v373 = vsel %vm371, %v372, %v367
      %v374 = vshrl.u32 %v373, 4
      %v375 = vand.u32 %v373, 15
      %v376 = vsub.s32 0, %v375
      %v377 = vsel %vm371, %v376, %v375
      %vm378 = vcmp.lt.s32.totalorder %v368, 0
      %v379 = vsub.s32 0, %v368
      %v380 = vsel %vm378, %v379, %v368
      %v381 = vshrl.u32 %v380, 4
      %v382 = vand.u32 %v380, 15
      %v383 = vsub.s32 0, %v382
      %v384 = vsel %vm378, %v383, %v382
      %vm385 = vcmp.lt.s32.totalorder %v369, 0
      %v386 = vsub.s32 0, %v369
      %v387 = vsel %vm385, %v386, %v369
      %v388 = vshrl.u32 %v387, 4
      %v389 = vand.u32 %v387, 15
      %v390 = vsub.s32 0, %v389
      %v391 = vsel %vm385, %v390, %v389
      %vm392 = vcmp.lt.s32.totalorder %v370, 0
      %v393 = vsub.s32 0, %v370
      %v394 = vsel %vm392, %v393, %v370
      %v395 = vshrl.u32 %v394, 4
      %v396 = vand.u32 %v394, 15
      %v397 = vsub.s32 0, %v396
      %v398 = vsel %vm392, %v397, %v396
      %vm399 = vcmp.ne.s32.totalorder %v377, 0
      %vm400 = vcmp.ne.s32.totalorder %v384, 0
      %vm401 = vcmp.ne.s32.totalorder %v391, 0
      %vm402 = vcmp.ne.s32.totalorder %v398, 0
      %vm403 = vcmp.lt.s32.totalorder %v377, 0
      %vm404 = vcmp.lt.s32.totalorder %v384, 0
      %vm405 = vcmp.lt.s32.totalorder %v391, 0
      %vm406 = vcmp.lt.s32.totalorder %v398, 0
      %vm407 = vmand %vm403, %vm399
      %vm408 = vmand %vm404, %vm400
      %vm409 = vmand %vm405, %vm401
      %vm410 = vmand %vm406, %vm402
      %v411 = vadd.s32 %v377, 16
      %v412 = vadd.s32 %v384, 16
      %v413 = vadd.s32 %v391, 16
      %v414 = vadd.s32 %v398, 16
      %v415 = vsel %vm407, %v411, %v377
      %v416 = vsel %vm408, %v412, %v384
      %v417 = vsel %vm409, %v413, %v391
      %v418 = vsel %vm410, %v414, %v398
      %v419 = vld [vmem:[#allocation2 + $0x4] sm:$0xff]
      %v420 = vld [vmem:[#allocation2 + $0xc] sm:$0xff]
      %v421 = vld [vmem:[#allocation2 + $0x14] sm:$0xff]
      %v422 = vld [vmem:[#allocation2 + $0x1c] sm:$0xff]
      %vm423 = vcmp.ge.s32.totalorder %v415, 4
      %vm424 = vcmp.ge.s32.totalorder %v416, 4
      %vm425 = vcmp.ge.s32.totalorder %v417, 4
      %vm426 = vcmp.ge.s32.totalorder %v418, 4
      %v427 = vsel %vm423, 1, 0
      %v428 = vsel %vm424, 1, 0
      %v429 = vsel %vm425, 1, 0
      %v430 = vsel %vm426, 1, 0
      %vm431 = vcmp.eq.s32.totalorder %v427, 1
      %vm432 = vcmp.eq.s32.totalorder %v428, 1
      %vm433 = vcmp.eq.s32.totalorder %v429, 1
      %vm434 = vcmp.eq.s32.totalorder %v430, 1
      %v435 = vsel %vm431, %v419, 0.0
      %v436 = vsel %vm432, %v420, 0.0
      %v437 = vsel %vm433, %v421, 0.0
      %v438 = vsel %vm434, %v422, 0.0
      %v439 = vld [vmem:[%s3] sm:$0xff]
      %v440 = vld [vmem:[%s3 + $0x8] sm:$0xff]
      %v441 = vld [vmem:[%s3 + $0x10] sm:$0xff]
      %v442 = vld [vmem:[%s3 + $0x18] sm:$0xff]
      %v443 = vld [vmem:[%s3 + $0x20] sm:$0xff]
      %v444 = vld [vmem:[%s3 + $0x28] sm:$0xff]
      %v445 = vld [vmem:[%s3 + $0x30] sm:$0xff]
      %v446 = vld [vmem:[%s3 + $0x38] sm:$0xff]
      %v447 = vld [vmem:[%s3 + $0x40] sm:$0xff]
      %v448 = vld [vmem:[%s3 + $0x48] sm:$0xff]
      %v449 = vld [vmem:[%s3 + $0x50] sm:$0xff]
      %v450 = vld [vmem:[%s3 + $0x58] sm:$0xff]
      %v451 = vld [vmem:[%s3 + $0x60] sm:$0xff]
      %v452 = vld [vmem:[%s3 + $0x68] sm:$0xff]
      %v453 = vld [vmem:[%s3 + $0x70] sm:$0xff]
      %v454 = vld [vmem:[%s3 + $0x78] sm:$0xff]
      %v455 = vld [vmem:[#allocation2 + $0x6] sm:$0xff]
      %v456 = vld [vmem:[#allocation2 + $0xe] sm:$0xff]
      %v457 = vld [vmem:[#allocation2 + $0x16] sm:$0xff]
      %v458 = vld [vmem:[#allocation2 + $0x1e] sm:$0xff]
      %vm459 = vcmp.ge.s32.totalorder %v415, 2
      %vm460 = vcmp.ge.s32.totalorder %v416, 2
      %vm461 = vcmp.ge.s32.totalorder %v417, 2
      %vm462 = vcmp.ge.s32.totalorder %v418, 2
      %v463 = vsel %vm459, 1, 0
      %v464 = vsel %vm460, 1, 0
      %v465 = vsel %vm461, 1, 0
      %v466 = vsel %vm462, 1, 0
      %vm467 = vcmp.eq.s32.totalorder %v463, 1
      %vm468 = vcmp.eq.s32.totalorder %v464, 1
      %vm469 = vcmp.eq.s32.totalorder %v465, 1
      %vm470 = vcmp.eq.s32.totalorder %v466, 1
      %v471 = vsel %vm467, %v455, 0.0
      %v472 = vsel %vm468, %v456, 0.0
      %v473 = vsel %vm469, %v457, 0.0
      %v474 = vsel %vm470, %v458, 0.0
      %v475 = vld [vmem:[%s3 + $0x80] sm:$0xff]
      %v476 = vld [vmem:[%s3 + $0x88] sm:$0xff]
      %v477 = vld [vmem:[%s3 + $0x90] sm:$0xff]
      %v478 = vld [vmem:[%s3 + $0x98] sm:$0xff]
      %v479 = vld [vmem:[%s3 + $0xa0] sm:$0xff]
      %v480 = vld [vmem:[%s3 + $0xa8] sm:$0xff]
      %v481 = vld [vmem:[%s3 + $0xb0] sm:$0xff]
      %v482 = vld [vmem:[%s3 + $0xb8] sm:$0xff]
      %v483 = vld [vmem:[%s3 + $0xc0] sm:$0xff]
      %v484 = vld [vmem:[%s3 + $0xc8] sm:$0xff]
      %v485 = vld [vmem:[%s3 + $0xd0] sm:$0xff]
      %v486 = vld [vmem:[%s3 + $0xd8] sm:$0xff]
      %v487 = vld [vmem:[%s3 + $0xe0] sm:$0xff]
      %v488 = vld [vmem:[%s3 + $0xe8] sm:$0xff]
      %v489 = vld [vmem:[%s3 + $0xf0] sm:$0xff]
      %v490 = vld [vmem:[%s3 + $0xf8] sm:$0xff]
      %491 = vmatprep.subr.mxu0 0.0
      %492 = vmatpush1.msra.mxu0 %v490
      %493 = vmatprep.subr.mxu0 0.0
      %494 = vmatpush1.msra.mxu0 %v489
      %495 = vmatprep.subr.mxu0 0.0
      %496 = vmatpush1.msra.mxu0 %v488
      %497 = vmatprep.subr.mxu0 0.0
      %498 = vmatpush1.msra.mxu0 %v487
      %499 = vmatprep.subr.mxu0 0.0
      %500 = vmatpush1.msra.mxu0 %v486
      %501 = vmatprep.subr.mxu0 0.0
      %502 = vmatpush1.msra.mxu0 %v485
      %503 = vmatprep.subr.mxu0 0.0
      %504 = vmatpush1.msra.mxu0 %v484
      %505 = vmatprep.subr.mxu0 0.0
      %506 = vmatpush1.msra.mxu0 %v483
      %507 = vmatprep.subr.mxu0 0.0
      %508 = vmatpush1.msra.mxu0 %v482
      %509 = vmatprep.subr.mxu0 0.0
      %510 = vmatpush1.msra.mxu0 %v481
      %511 = vmatprep.subr.mxu0 0.0
      %512 = vmatpush1.msra.mxu0 %v480
      %513 = vmatprep.subr.mxu0 0.0
      %514 = vmatpush1.msra.mxu0 %v479
      %515 = vmatprep.subr.mxu0 0.0
      %516 = vmatpush1.msra.mxu0 %v478
      %517 = vmatprep.subr.mxu0 0.0
      %518 = vmatpush1.msra.mxu0 %v477
      %519 = vmatprep.subr.mxu0 0.0
      %520 = vmatpush1.msra.mxu0 %v476
      %521 = vmatprep.subr.mxu0 0.0
      %522 = vmatpush1.msra.mxu0 %v475
      %523 = vmatprep.subr.mxu0 0.0
      %524 = vmatpush2.msra.mxu0 0.0
      %525 = vmatprep.subr.mxu0 0.0
      %526 = vmatpush2.msra.mxu0 0.0
      %527 = vmatprep.subr.mxu0 0.0
      %528 = vmatpush2.msra.mxu0 0.0
      %529 = vmatprep.subr.mxu0 0.0
      %530 = vmatpush2.msra.mxu0 0.0
      %531 = vmatprep.subr.mxu0 0.0
      %532 = vmatpush2.msra.mxu0 0.0
      %533 = vmatprep.subr.mxu0 0.0
      %534 = vmatpush2.msra.mxu0 0.0
      %535 = vmatprep.subr.mxu0 0.0
      %536 = vmatpush2.msra.mxu0 0.0
      %537 = vmatprep.subr.mxu0 0.0
      %538 = vmatpush2.msra.mxu0 0.0
      %539 = vmatprep.subr.mxu0 0.0
      %540 = vmatpush2.msra.mxu0 0.0
      %541 = vmatprep.subr.mxu0 0.0
      %542 = vmatpush2.msra.mxu0 0.0
      %543 = vmatprep.subr.mxu0 0.0
      %544 = vmatpush2.msra.mxu0 0.0
      %545 = vmatprep.subr.mxu0 0.0
      %546 = vmatpush2.msra.mxu0 0.0
      %547 = vmatprep.subr.mxu0 0.0
      %548 = vmatpush2.msra.mxu0 0.0
      %549 = vmatprep.subr.mxu0 0.0
      %550 = vmatpush2.msra.mxu0 0.0
      %551 = vmatprep.subr.mxu0 0.0
      %552 = vmatpush2.msra.mxu0 0.0
      %553 = vmatprep.subr.mxu0 0.0
      %554 = vmatpush2.msra.mxu0 0.0
      %555 = vmatprep.mubr.f32.mxu0 0.0
      %556 = vmatmul.mubr.f32.gmra.mxu0 %v471
      %v557 = vpop.f32.mrf.mxu0
      %v558 = vadd.f32 0.0, %v557
      %v559 = vpop.f32.mrf.mxu0
      %560 = vmatprep.mubr.f32.mxu0 0.0
      %561 = vmatmul.mubr.f32.gmra.mxu0 %v472
      %v562 = vpop.f32.mrf.mxu0
      %v563 = vadd.f32 0.0, %v562
      %v564 = vpop.f32.mrf.mxu0
      %565 = vmatprep.mubr.f32.mxu0 0.0
      %566 = vmatmul.mubr.f32.gmra.mxu0 %v473
      %v567 = vpop.f32.mrf.mxu0
      %v568 = vadd.f32 0.0, %v567
      %v569 = vpop.f32.mrf.mxu0
      %570 = vmatprep.mubr.f32.mxu0 0.0
      %571 = vmatmul.mubr.f32.gmra.mxu0 %v474
      %v572 = vpop.f32.mrf.mxu0
      %v573 = vadd.f32 0.0, %v572
      %v574 = vpop.f32.mrf.mxu0
      %575 = vdwg.mxu0
      %576 = vmatprep.subr.mxu0 0.0
      %577 = vmatpush1.msra.mxu0 %v454
      %578 = vmatprep.subr.mxu0 0.0
      %579 = vmatpush1.msra.mxu0 %v453
      %580 = vmatprep.subr.mxu0 0.0
      %581 = vmatpush1.msra.mxu0 %v452
      %582 = vmatprep.subr.mxu0 0.0
      %583 = vmatpush1.msra.mxu0 %v451
      %584 = vmatprep.subr.mxu0 0.0
      %585 = vmatpush1.msra.mxu0 %v450
      %586 = vmatprep.subr.mxu0 0.0
      %587 = vmatpush1.msra.mxu0 %v449
      %588 = vmatprep.subr.mxu0 0.0
      %589 = vmatpush1.msra.mxu0 %v448
      %590 = vmatprep.subr.mxu0 0.0
      %591 = vmatpush1.msra.mxu0 %v447
      %592 = vmatprep.subr.mxu0 0.0
      %593 = vmatpush1.msra.mxu0 %v446
      %594 = vmatprep.subr.mxu0 0.0
      %595 = vmatpush1.msra.mxu0 %v445
      %596 = vmatprep.subr.mxu0 0.0
      %597 = vmatpush1.msra.mxu0 %v444
      %598 = vmatprep.subr.mxu0 0.0
      %599 = vmatpush1.msra.mxu0 %v443
      %600 = vmatprep.subr.mxu0 0.0
      %601 = vmatpush1.msra.mxu0 %v442
      %602 = vmatprep.subr.mxu0 0.0
      %603 = vmatpush1.msra.mxu0 %v441
      %604 = vmatprep.subr.mxu0 0.0
      %605 = vmatpush1.msra.mxu0 %v440
      %606 = vmatprep.subr.mxu0 0.0
      %607 = vmatpush1.msra.mxu0 %v439
      %608 = vmatprep.subr.mxu0 0.0
      %609 = vmatpush2.msra.mxu0 0.0
      %610 = vmatprep.subr.mxu0 0.0
      %611 = vmatpush2.msra.mxu0 0.0
      %612 = vmatprep.subr.mxu0 0.0
      %613 = vmatpush2.msra.mxu0 0.0
      %614 = vmatprep.subr.mxu0 0.0
      %615 = vmatpush2.msra.mxu0 0.0
      %616 = vmatprep.subr.mxu0 0.0
      %617 = vmatpush2.msra.mxu0 0.0
      %618 = vmatprep.subr.mxu0 0.0
      %619 = vmatpush2.msra.mxu0 0.0
      %620 = vmatprep.subr.mxu0 0.0
      %621 = vmatpush2.msra.mxu0 0.0
      %622 = vmatprep.subr.mxu0 0.0
      %623 = vmatpush2.msra.mxu0 0.0
      %624 = vmatprep.subr.mxu0 0.0
      %625 = vmatpush2.msra.mxu0 0.0
      %626 = vmatprep.subr.mxu0 0.0
      %627 = vmatpush2.msra.mxu0 0.0
      %628 = vmatprep.subr.mxu0 0.0
      %629 = vmatpush2.msra.mxu0 0.0
      %630 = vmatprep.subr.mxu0 0.0
      %631 = vmatpush2.msra.mxu0 0.0
      %632 = vmatprep.subr.mxu0 0.0
      %633 = vmatpush2.msra.mxu0 0.0
      %634 = vmatprep.subr.mxu0 0.0
      %635 = vmatpush2.msra.mxu0 0.0
      %636 = vmatprep.subr.mxu0 0.0
      %637 = vmatpush2.msra.mxu0 0.0
      %638 = vmatprep.subr.mxu0 0.0
      %639 = vmatpush2.msra.mxu0 0.0
      %640 = vmatprep.mubr.f32.mxu0 0.0
      %641 = vmatmul.mubr.f32.gmra.mxu0 %v435
      %v642 = vpop.f32.mrf.mxu0
      %v643 = vadd.f32 %v558, %v642
      %v644 = vpop.f32.mrf.mxu0
      %645 = vmatprep.mubr.f32.mxu0 0.0
      %646 = vmatmul.mubr.f32.gmra.mxu0 %v436
      %v647 = vpop.f32.mrf.mxu0
      %v648 = vadd.f32 %v563, %v647
      %v649 = vpop.f32.mrf.mxu0
      %650 = vmatprep.mubr.f32.mxu0 0.0
      %651 = vmatmul.mubr.f32.gmra.mxu0 %v437
      %v652 = vpop.f32.mrf.mxu0
      %v653 = vadd.f32 %v568, %v652
      %v654 = vpop.f32.mrf.mxu0
      %655 = vmatprep.mubr.f32.mxu0 0.0
      %656 = vmatmul.mubr.f32.gmra.mxu0 %v438
      %v657 = vpop.f32.mrf.mxu0
      %v658 = vadd.f32 %v573, %v657
      %v659 = vpop.f32.mrf.mxu0
      %660 = vdwg.mxu0
      %v661 = vld [vmem:[#allocation2 + $0x8] sm:$0xff]
      %v662 = vld [vmem:[#allocation2 + $0x10] sm:$0xff]
      %v663 = vld [vmem:[#allocation2 + $0x18] sm:$0xff]
      %v664 = vld [vmem:[#allocation2 + $0x20] sm:$0xff]
      %v665 = vld [vmem:[%s3 + $0x100] sm:$0xff]
      %v666 = vld [vmem:[%s3 + $0x108] sm:$0xff]
      %v667 = vld [vmem:[%s3 + $0x110] sm:$0xff]
      %v668 = vld [vmem:[%s3 + $0x118] sm:$0xff]
      %v669 = vld [vmem:[%s3 + $0x120] sm:$0xff]
      %v670 = vld [vmem:[%s3 + $0x128] sm:$0xff]
      %v671 = vld [vmem:[%s3 + $0x130] sm:$0xff]
      %v672 = vld [vmem:[%s3 + $0x138] sm:$0xff]
      %v673 = vld [vmem:[%s3 + $0x140] sm:$0xff]
      %v674 = vld [vmem:[%s3 + $0x148] sm:$0xff]
      %v675 = vld [vmem:[%s3 + $0x150] sm:$0xff]
      %v676 = vld [vmem:[%s3 + $0x158] sm:$0xff]
      %v677 = vld [vmem:[%s3 + $0x160] sm:$0xff]
      %v678 = vld [vmem:[%s3 + $0x168] sm:$0xff]
      %v679 = vld [vmem:[%s3 + $0x170] sm:$0xff]
      %v680 = vld [vmem:[%s3 + $0x178] sm:$0xff]
      %681 = vmatprep.subr.mxu0 0.0
      %682 = vmatpush1.msra.mxu0 %v680
      %683 = vmatprep.subr.mxu0 0.0
      %684 = vmatpush1.msra.mxu0 %v679
      %685 = vmatprep.subr.mxu0 0.0
      %686 = vmatpush1.msra.mxu0 %v678
      %687 = vmatprep.subr.mxu0 0.0
      %688 = vmatpush1.msra.mxu0 %v677
      %689 = vmatprep.subr.mxu0 0.0
      %690 = vmatpush1.msra.mxu0 %v676
      %691 = vmatprep.subr.mxu0 0.0
      %692 = vmatpush1.msra.mxu0 %v675
      %693 = vmatprep.subr.mxu0 0.0
      %694 = vmatpush1.msra.mxu0 %v674
      %695 = vmatprep.subr.mxu0 0.0
      %696 = vmatpush1.msra.mxu0 %v673
      %697 = vmatprep.subr.mxu0 0.0
      %698 = vmatpush1.msra.mxu0 %v672
      %699 = vmatprep.subr.mxu0 0.0
      %700 = vmatpush1.msra.mxu0 %v671
      %701 = vmatprep.subr.mxu0 0.0
      %702 = vmatpush1.msra.mxu0 %v670
      %703 = vmatprep.subr.mxu0 0.0
      %704 = vmatpush1.msra.mxu0 %v669
      %705 = vmatprep.subr.mxu0 0.0
      %706 = vmatpush1.msra.mxu0 %v668
      %707 = vmatprep.subr.mxu0 0.0
      %708 = vmatpush1.msra.mxu0 %v667
      %709 = vmatprep.subr.mxu0 0.0
      %710 = vmatpush1.msra.mxu0 %v666
      %711 = vmatprep.subr.mxu0 0.0
      %712 = vmatpush1.msra.mxu0 %v665
      %713 = vmatprep.subr.mxu0 0.0
      %714 = vmatpush2.msra.mxu0 0.0
      %715 = vmatprep.subr.mxu0 0.0
      %716 = vmatpush2.msra.mxu0 0.0
      %717 = vmatprep.subr.mxu0 0.0
      %718 = vmatpush2.msra.mxu0 0.0
      %719 = vmatprep.subr.mxu0 0.0
      %720 = vmatpush2.msra.mxu0 0.0
      %721 = vmatprep.subr.mxu0 0.0
      %722 = vmatpush2.msra.mxu0 0.0
      %723 = vmatprep.subr.mxu0 0.0
      %724 = vmatpush2.msra.mxu0 0.0
      %725 = vmatprep.subr.mxu0 0.0
      %726 = vmatpush2.msra.mxu0 0.0
      %727 = vmatprep.subr.mxu0 0.0
      %728 = vmatpush2.msra.mxu0 0.0
      %729 = vmatprep.subr.mxu0 0.0
      %730 = vmatpush2.msra.mxu0 0.0
      %731 = vmatprep.subr.mxu0 0.0
      %732 = vmatpush2.msra.mxu0 0.0
      %733 = vmatprep.subr.mxu0 0.0
      %734 = vmatpush2.msra.mxu0 0.0
      %735 = vmatprep.subr.mxu0 0.0
      %736 = vmatpush2.msra.mxu0 0.0
      %737 = vmatprep.subr.mxu0 0.0
      %738 = vmatpush2.msra.mxu0 0.0
      %739 = vmatprep.subr.mxu0 0.0
      %740 = vmatpush2.msra.mxu0 0.0
      %741 = vmatprep.subr.mxu0 0.0
      %742 = vmatpush2.msra.mxu0 0.0
      %743 = vmatprep.subr.mxu0 0.0
      %744 = vmatpush2.msra.mxu0 0.0
      %745 = vmatprep.mubr.f32.mxu0 0.0
      %746 = vmatmul.mubr.f32.gmra.mxu0 %v661
      %v747 = vpop.f32.mrf.mxu0
      %v748 = vadd.f32 0.0, %v747
      %v749 = vpop.f32.mrf.mxu0
      %750 = vmatprep.mubr.f32.mxu0 0.0
      %751 = vmatmul.mubr.f32.gmra.mxu0 %v662
      %v752 = vpop.f32.mrf.mxu0
      %v753 = vadd.f32 0.0, %v752
      %v754 = vpop.f32.mrf.mxu0
      %755 = vmatprep.mubr.f32.mxu0 0.0
      %756 = vmatmul.mubr.f32.gmra.mxu0 %v663
      %v757 = vpop.f32.mrf.mxu0
      %v758 = vadd.f32 0.0, %v757
      %v759 = vpop.f32.mrf.mxu0
      %760 = vmatprep.mubr.f32.mxu0 0.0
      %761 = vmatmul.mubr.f32.gmra.mxu0 %v664
      %v762 = vpop.f32.mrf.mxu0
      %v763 = vadd.f32 0.0, %v762
      %v764 = vpop.f32.mrf.mxu0
      %765 = vdwg.mxu0
      %v766 = vadd.f32 %v643, %v748
      %v767 = vadd.f32 %v648, %v753
      %v768 = vadd.f32 %v653, %v758
      %v769 = vadd.f32 %v658, %v763
      %v770 = vld [vmem:[%s4] sm:$0x1]
      %v772 = vlaneseq
      %v773 = vshrl.u32 %v772, 7
      %v774 = vsub.s32 0, %v773
      %v775 = vrot.slane %v770, %v774
      %v777 = vadd.f32 %v766, %v775
      %v778 = vadd.f32 %v767, %v775
      %v779 = vadd.f32 %v768, %v775
      %v780 = vadd.f32 %v769, %v775
      %v781 = vmax.f32 %v777, 0.0
      %v782 = vmax.f32 %v778, 0.0
      %v783 = vmax.f32 %v779, 0.0
      %v784 = vmax.f32 %v780, 0.0
      %v785 = vadd.f32 %v781, %v337
      %v786 = vadd.f32 %v782, %v343
      %v787 = vadd.f32 %v783, %v349
      %v788 = vadd.f32 %v784, %v355
      %v789 = vmax.f32 %v785, 0.0
      %v790 = vmax.f32 %v786, 0.0
      %v791 = vmax.f32 %v787, 0.0
      %v792 = vmax.f32 %v788, 0.0
      %793 = vst [vmem:[%s226] sm:$0xff] %v789
      %794 = vst [vmem:[%s226 + $0x8] sm:$0xff] %v790
      %795 = vst [vmem:[%s226 + $0x10] sm:$0xff] %v791
      %796 = vst [vmem:[%s226 + $0x18] sm:$0xff] %v792
      %s797 = smul.u32 4, %s16
      %p798 = scmp.lt.s32.totalorder %s797, 7
      %s799 = scalar_select %p798, %s797, 7
      %s800 = smul.addr %s799, 8
      %s801 = scalar_lea.vmem %s5, %s800
      // Predicated region
      $region41: #{temporal_block.1} parent=39 // pred_check
        %p802 = pneg %p144
      $region42: #{temporal_block.1} parent=39 // pred_check_branch
        %804 = sbr.rel (%p802) target = $region44
      $region43: #{temporal_block.1} parent=39 // pred_region
        %s805 = smul.u32 4, %s16
      $region44: #{temporal_block.1} parent=39 // pred_fallthru
        _
    $region40: #{temporal_block.1} parent=5 // pred_fallthru
      _
    %p806 = scmp.le.s32.totalorder 2, %s11
    // Predicated region
    $region45: #{temporal_block.1} parent=5 // pred_check
      %p807 = pneg %p806
    $region46: #{temporal_block.1} parent=5 // pred_check_branch
      %809 = sbr.rel (%p807) target = $region48
    $region47: #{temporal_block.1} parent=5 // pred_region
      %s810 = ssub.s32 %s11, 2
      // Predicated region
      $region49: #{temporal_block.1} parent=47 // pred_check
        %p811 = pneg %p150
      $region50: #{temporal_block.1} parent=47 // pred_check_branch
        %813 = sbr.rel (%p811) target = $region52
      $region51: #{temporal_block.1} parent=47 // pred_region
        %s814 = smul.u32 4, %s17
        %p815 = scmp.lt.s32.totalorder %s814, 7
        %s816 = scalar_select %p815, %s814, 7
        %s817 = smul.addr %s816, 8
        %s818 = scalar_lea.vmem %s5, %s817
      $region52: #{temporal_block.1} parent=47 // pred_fallthru
        _
    $region48: #{temporal_block.1} parent=5 // pred_fallthru
      _
  $region6: #{temporal_block.1} parent=0 // loop_footer
    %s15 = sadd.s32 1, %s11
  $region7: #{temporal_block.1} parent=0 // loop_footer_branch
    %10 = sbr.rel target = $region3
  $region8: #{temporal_block.1} parent=0 // loop_exit
    _

</llo_original>
